<compile_context>
chip_gen: v7x
topology: tpu7x:2x2x1
jax: 0.10.0
libtpu: 0.0.40
codegen_flags: <defaults>
</compile_context>

<pallas_src>
import functools

import jax
import jax.numpy as jnp
from jax import lax
from jax.experimental import pallas as pl
from jax.experimental.pallas import tpu as pltpu

STATE_SPACE = 4    # CartPole-v1 observation_space.shape[0]
ACTION_SPACE = 2   # CartPole-v1 action_space.n
HIDDEN = 128


def _round_up(n, m):
    return ((n + m - 1) // m) * m


def _policy_kernel(seed_ref, x_ref, w1_ref, w2d_ref, out_ref, *, training, bm):
    # x: (bm, S) f32, w1: (S, H) f32, w2d: (1, H) f32 (= w2[:,1] - w2[:,0]),
    # out: (bm, 2) f32
    x = x_ref[...]

    # ---- l1: Linear(4 -> 128, bias=False) as VPU multiply-adds (no MXU) -----
    h = x[:, 0:1] * w1_ref[0:1, :]
    for k in range(1, STATE_SPACE):            # static unroll, K = 4
        h = h + x[:, k:k + 1] * w1_ref[k:k + 1, :]

    # ---- Dropout(p=0.5) fused with ReLU --------------------------------------
    if training:
        # Counter-based hash (splitmix32-style): portable jnp ops only.
        seed = seed_ref[0].astype(jnp.uint32)
        base = (pl.program_id(0) * bm).astype(jnp.uint32)   # global row offset
        row = lax.broadcasted_iota(jnp.uint32, h.shape, 0) + base
        col = lax.broadcasted_iota(jnp.uint32, h.shape, 1)
        z = row * jnp.uint32(HIDDEN) + col + seed * jnp.uint32(0x9E3779B9)
        z = (z ^ (z >> jnp.uint32(16))) * jnp.uint32(0x85EBCA6B)
        z = (z ^ (z >> jnp.uint32(13))) * jnp.uint32(0xC2B2AE35)
        z = z ^ (z >> jnp.uint32(16))
        keep = (z >> jnp.uint32(31)) == jnp.uint32(1)   # Bernoulli(0.5), high bit
        # relu(dropout(h)): kept & positive -> h / (1 - p) = 2*h, else 0
        h = jnp.where(keep & (h > 0.0), h * 2.0, 0.0)
    else:
        h = jnp.maximum(h, 0.0)

    # ---- l2 + 2-class softmax fused into a sigmoid ----------------------------
    d = jnp.sum(h * w2d_ref[...], axis=-1, keepdims=True)   # (bm, 1): logit1-logit0
    p1 = 1.0 / (1.0 + jnp.exp(-d))
    out_ref[...] = jnp.concatenate([1.0 - p1, p1], axis=-1)


def policy_forward(x, w1, w2, seed, *, training=True):
    """x: (B, 4) f32; w1: (4, 128) f32; w2: (128, 2) f32 (stored as (in, out)).

    `seed` must vary per timestep/call for independent dropout masks.
    """
    B = x.shape[0]
    assert x.shape[1] == STATE_SPACE
    assert w1.shape == (STATE_SPACE, HIDDEN)
    assert w2.shape == (HIDDEN, ACTION_SPACE) and ACTION_SPACE == 2

    # Batch tile: multiple of 8 (sublane), capped so VMEM stays tiny.
    bm = min(512, _round_up(max(B, 1), 8))
    B_pad = _round_up(B, bm)
    nb = B_pad // bm
    if B_pad != B:
        x = jnp.pad(x, ((0, B_pad - B), (0, 0)))

    # 2-class softmax only needs the per-hidden-unit logit difference.
    w2_diff = (w2[:, 1] - w2[:, 0]).reshape(1, HIDDEN)
    seed_arr = jnp.asarray([seed], dtype=jnp.int32)
    kernel = functools.partial(_policy_kernel, training=training, bm=bm)

    out = pl.pallas_call(
        kernel,
        out_shape=jax.ShapeDtypeStruct((B_pad, ACTION_SPACE), jnp.float32),
        grid_spec=pltpu.PrefetchScalarGridSpec(
            num_scalar_prefetch=1,              # seed -> SMEM
            grid=(nb,),
            in_specs=[
                pl.BlockSpec((bm, STATE_SPACE), lambda i, s: (i, 0)),   # x
                pl.BlockSpec((STATE_SPACE, HIDDEN), lambda i, s: (0, 0)),  # w1
                pl.BlockSpec((1, HIDDEN), lambda i, s: (0, 0)),         # w2_diff
            ],
            out_specs=pl.BlockSpec((bm, ACTION_SPACE), lambda i, s: (i, 0)),
        ),
        compiler_params=pltpu.CompilerParams(
            dimension_semantics=("parallel",)),
    )(seed_arr, x, w1, w2_diff)

    return out[:B] if B_pad != B else out


def init_params(key):
    """Init mimicking PyTorch Linear default U(-1/sqrt(fan_in), 1/sqrt(fan_in))."""
    k1, k2 = jax.random.split(key)
    b1 = 1.0 / jnp.sqrt(jnp.float32(STATE_SPACE))
    b2 = 1.0 / jnp.sqrt(jnp.float32(HIDDEN))
    # stored pre-transposed: (in, out)
    w1 = jax.random.uniform(k1, (STATE_SPACE, HIDDEN), jnp.float32, -b1, b1)
    w2 = jax.random.uniform(k2, (HIDDEN, ACTION_SPACE), jnp.float32, -b2, b2)
    return w1, w2


if __name__ == "__main__":
    key = jax.random.PRNGKey(0)
    kx, kp = jax.random.split(key)

    batch = 8
    x = jax.random.normal(kx, (batch, STATE_SPACE), jnp.float32)
    w1, w2 = init_params(kp)

    # Training mode (matches the PyTorch module's default: Dropout active).
    probs_train = jax.block_until_ready(
        policy_forward(x, w1, w2, seed=1234, training=True))
    assert probs_train.shape == (batch, ACTION_SPACE)
    assert bool(jnp.all(jnp.isfinite(probs_train)))
    assert bool(jnp.allclose(jnp.sum(probs_train, axis=-1), 1.0, atol=1e-5))

    # Same seed -> identical dropout mask -> identical output (deterministic).
    probs_train2 = jax.block_until_ready(
        policy_forward(x, w1, w2, seed=1234, training=True))
    assert bool(jnp.array_equal(probs_train, probs_train2))

    # Eval mode (dropout = identity): check against a pure-JAX reference.
    probs_eval = jax.block_until_ready(
        policy_forward(x, w1, w2, seed=0, training=False))
    ref = jax.nn.softmax(jnp.maximum(x @ w1, 0.0) @ w2, axis=-1)
    assert bool(jnp.allclose(probs_eval, ref, atol=1e-5, rtol=1e-5))

    # Non-multiple-of-8 batch exercises the padding path.
    x5 = x[:5]
    probs5 = jax.block_until_ready(
        policy_forward(x5, w1, w2, seed=0, training=False))
    ref5 = jax.nn.softmax(jnp.maximum(x5 @ w1, 0.0) @ w2, axis=-1)
    assert probs5.shape == (5, ACTION_SPACE)
    assert bool(jnp.allclose(probs5, ref5, atol=1e-5, rtol=1e-5))

    print("KERNEL_OK")
</pallas_src>

<mosaic_0001>
module attributes {stable_mosaic.version = 11 : i64} {
  func.func @_policy_kernel(%arg0: i32, %arg1: memref<1xi32, #tpu.memory_space<smem>>, %arg2: memref<8x4xf32, #tpu.memory_space<vmem>>, %arg3: memref<4x128xf32, #tpu.memory_space<vmem>>, %arg4: memref<1x128xf32, #tpu.memory_space<vmem>>, %arg5: memref<8x2xf32, #tpu.memory_space<vmem>>) attributes {dimension_semantics = [#tpu.dimension_semantics<parallel>], iteration_bounds = array<i64: 1>, scalar_prefetch = 1 : i64, scratch_operands = 0 : i64, tpu.core_type = #tpu.core_type<tc>, window_params = [{transform_indices = @transform_0, window_bounds = array<i64: 8, 4>}, {pipeline_mode = #tpu.pipeline_mode<synchronous>, transform_indices = @transform_1, window_bounds = array<i64: 4, 128>}, {pipeline_mode = #tpu.pipeline_mode<synchronous>, transform_indices = @transform_2, window_bounds = array<i64: 1, 128>}, {transform_indices = @transform_3, window_bounds = array<i64: 8, 2>}]} {
    %c0 = arith.constant 0 : index
    %c0_0 = arith.constant 0 : index
    %0 = vector.load %arg2[%c0, %c0_0] : memref<8x4xf32, #tpu.memory_space<vmem>>, vector<8x4xf32>
    %1 = vector.extract_strided_slice %0 {offsets = [0, 0], sizes = [8, 1], strides = [1, 1]} : vector<8x4xf32> to vector<8x1xf32>
    %c0_1 = arith.constant 0 : index
    %c0_2 = arith.constant 0 : index
    %2 = vector.load %arg3[%c0_1, %c0_2] : memref<4x128xf32, #tpu.memory_space<vmem>>, vector<1x128xf32>
    %3 = vector.broadcast %1 : vector<8x1xf32> to vector<8x128xf32>
    %4 = vector.broadcast %2 : vector<1x128xf32> to vector<8x128xf32>
    %5 = arith.mulf %3, %4 : vector<8x128xf32>
    %6 = vector.extract_strided_slice %0 {offsets = [0, 1], sizes = [8, 1], strides = [1, 1]} : vector<8x4xf32> to vector<8x1xf32>
    %c1 = arith.constant 1 : index
    %c0_3 = arith.constant 0 : index
    %7 = vector.load %arg3[%c1, %c0_3] : memref<4x128xf32, #tpu.memory_space<vmem>>, vector<1x128xf32>
    %8 = vector.broadcast %6 : vector<8x1xf32> to vector<8x128xf32>
    %9 = vector.broadcast %7 : vector<1x128xf32> to vector<8x128xf32>
    %10 = arith.mulf %8, %9 : vector<8x128xf32>
    %11 = arith.addf %5, %10 : vector<8x128xf32>
    %12 = vector.extract_strided_slice %0 {offsets = [0, 2], sizes = [8, 1], strides = [1, 1]} : vector<8x4xf32> to vector<8x1xf32>
    %c2 = arith.constant 2 : index
    %c0_4 = arith.constant 0 : index
    %13 = vector.load %arg3[%c2, %c0_4] : memref<4x128xf32, #tpu.memory_space<vmem>>, vector<1x128xf32>
    %14 = vector.broadcast %12 : vector<8x1xf32> to vector<8x128xf32>
    %15 = vector.broadcast %13 : vector<1x128xf32> to vector<8x128xf32>
    %16 = arith.mulf %14, %15 : vector<8x128xf32>
    %17 = arith.addf %11, %16 : vector<8x128xf32>
    %18 = vector.extract_strided_slice %0 {offsets = [0, 3], sizes = [8, 1], strides = [1, 1]} : vector<8x4xf32> to vector<8x1xf32>
    %c3 = arith.constant 3 : index
    %c0_5 = arith.constant 0 : index
    %19 = vector.load %arg3[%c3, %c0_5] : memref<4x128xf32, #tpu.memory_space<vmem>>, vector<1x128xf32>
    %20 = vector.broadcast %18 : vector<8x1xf32> to vector<8x128xf32>
    %21 = vector.broadcast %19 : vector<1x128xf32> to vector<8x128xf32>
    %22 = arith.mulf %20, %21 : vector<8x128xf32>
    %23 = arith.addf %17, %22 : vector<8x128xf32>
    %c0_6 = arith.constant 0 : index
    %24 = memref.load %arg1[%c0_6] : memref<1xi32, #tpu.memory_space<smem>>
    %c8_i32 = arith.constant 8 : i32
    %25 = arith.muli %arg0, %c8_i32 : i32
    %26 = tpu.iota {dimensions = array<i32: 0>} : vector<8x128xi32>
    %27 = vector.broadcast %25 : i32 to vector<8x128xi32>
    %28 = arith.addi %26, %27 : vector<8x128xi32>
    %29 = tpu.iota {dimensions = array<i32: 1>} : vector<8x128xi32>
    %c128_i32 = arith.constant 128 : i32
    %30 = vector.broadcast %c128_i32 : i32 to vector<8x128xi32>
    %31 = arith.muli %28, %30 : vector<8x128xi32>
    %32 = arith.addi %31, %29 : vector<8x128xi32>
    %c-1640531527_i32 = arith.constant -1640531527 : i32
    %33 = arith.muli %24, %c-1640531527_i32 : i32
    %34 = vector.broadcast %33 : i32 to vector<8x128xi32>
    %35 = arith.addi %32, %34 : vector<8x128xi32>
    %c16_i32 = arith.constant 16 : i32
    %36 = vector.broadcast %c16_i32 : i32 to vector<8x128xi32>
    %37 = arith.shrui %35, %36 : vector<8x128xi32>
    %38 = arith.xori %35, %37 : vector<8x128xi32>
    %c-2048144789_i32 = arith.constant -2048144789 : i32
    %39 = vector.broadcast %c-2048144789_i32 : i32 to vector<8x128xi32>
    %40 = arith.muli %38, %39 : vector<8x128xi32>
    %c13_i32 = arith.constant 13 : i32
    %41 = vector.broadcast %c13_i32 : i32 to vector<8x128xi32>
    %42 = arith.shrui %40, %41 : vector<8x128xi32>
    %43 = arith.xori %40, %42 : vector<8x128xi32>
    %c-1028477387_i32 = arith.constant -1028477387 : i32
    %44 = vector.broadcast %c-1028477387_i32 : i32 to vector<8x128xi32>
    %45 = arith.muli %43, %44 : vector<8x128xi32>
    %c16_i32_7 = arith.constant 16 : i32
    %46 = vector.broadcast %c16_i32_7 : i32 to vector<8x128xi32>
    %47 = arith.shrui %45, %46 : vector<8x128xi32>
    %48 = arith.xori %45, %47 : vector<8x128xi32>
    %c31_i32 = arith.constant 31 : i32
    %49 = vector.broadcast %c31_i32 : i32 to vector<8x128xi32>
    %50 = arith.shrui %48, %49 : vector<8x128xi32>
    %c1_i32 = arith.constant 1 : i32
    %51 = vector.broadcast %c1_i32 : i32 to vector<8x128xi32>
    %52 = arith.cmpi eq, %50, %51 : vector<8x128xi32>
    %cst = arith.constant 0.000000e+00 : f32
    %53 = vector.broadcast %cst : f32 to vector<8x128xf32>
    %54 = arith.cmpf ogt, %23, %53 : vector<8x128xf32>
    %55 = arith.andi %52, %54 : vector<8x128xi1>
    %cst_8 = arith.constant 2.000000e+00 : f32
    %56 = vector.broadcast %cst_8 : f32 to vector<8x128xf32>
    %57 = arith.mulf %23, %56 : vector<8x128xf32>
    %cst_9 = arith.constant 0.000000e+00 : f32
    %58 = vector.broadcast %cst_9 : f32 to vector<8x128xf32>
    %59 = arith.select %55, %57, %58 : vector<8x128xi1>, vector<8x128xf32>
    %c0_10 = arith.constant 0 : index
    %c0_11 = arith.constant 0 : index
    %60 = vector.load %arg4[%c0_10, %c0_11] : memref<1x128xf32, #tpu.memory_space<vmem>>, vector<1x128xf32>
    %61 = vector.broadcast %60 : vector<1x128xf32> to vector<8x128xf32>
    %62 = arith.mulf %59, %61 : vector<8x128xf32>
    %cst_12 = arith.constant dense<0.000000e+00> : vector<8xf32>
    %63 = vector.multi_reduction <add>, %62, %cst_12 [1] : vector<8x128xf32> to vector<8xf32>
    %64 = vector.shape_cast %63 : vector<8xf32> to vector<8x1xf32>
    %cst_13 = arith.constant 0.000000e+00 : f32
    %65 = vector.broadcast %cst_13 : f32 to vector<8x1xf32>
    %66 = arith.subf %65, %64 : vector<8x1xf32>
    %67 = math.exp %66 : vector<8x1xf32>
    %cst_14 = arith.constant 1.000000e+00 : f32
    %68 = vector.broadcast %cst_14 : f32 to vector<8x1xf32>
    %69 = arith.addf %68, %67 : vector<8x1xf32>
    %cst_15 = arith.constant 1.000000e+00 : f32
    %70 = vector.broadcast %cst_15 : f32 to vector<8x1xf32>
    %71 = arith.divf %70, %69 : vector<8x1xf32>
    %cst_16 = arith.constant 1.000000e+00 : f32
    %72 = vector.broadcast %cst_16 : f32 to vector<8x1xf32>
    %73 = arith.subf %72, %71 : vector<8x1xf32>
    %74 = tpu.concatenate %73, %71 in 1 : vector<8x1xf32>, vector<8x1xf32> -> vector<8x2xf32>
    %c0_17 = arith.constant 0 : index
    %c0_18 = arith.constant 0 : index
    %75 = vector.load %arg5[%c0_17, %c0_18] : memref<8x2xf32, #tpu.memory_space<vmem>>, vector<8x2xf32>
    tpu.vector_store %arg5[%c0_17, %c0_18], %74 {strides = array<i32>} : memref<8x2xf32, #tpu.memory_space<vmem>>, vector<8x2xf32>,
    return
  }
  func.func @transform_0(%arg0: i32, %arg1: memref<1xi32, #tpu.memory_space<smem>>) -> (i32, i32) {
    %c0_i32 = arith.constant 0 : i32
    %c0_i32_0 = arith.constant 0 : i32
    return %arg0, %c0_i32 : i32, i32
  }
  func.func @transform_1(%arg0: i32, %arg1: memref<1xi32, #tpu.memory_space<smem>>) -> (i32, i32) {
    %c0_i32 = arith.constant 0 : i32
    %c0_i32_0 = arith.constant 0 : i32
    %c0_i32_1 = arith.constant 0 : i32
    return %c0_i32, %c0_i32_0 : i32, i32
  }
  func.func @transform_2(%arg0: i32, %arg1: memref<1xi32, #tpu.memory_space<smem>>) -> (i32, i32) {
    %c0_i32 = arith.constant 0 : i32
    %c0_i32_0 = arith.constant 0 : i32
    %c0_i32_1 = arith.constant 0 : i32
    return %c0_i32, %c0_i32_0 : i32, i32
  }
  func.func @transform_3(%arg0: i32, %arg1: memref<1xi32, #tpu.memory_space<smem>>) -> (i32, i32) {
    %c0_i32 = arith.constant 0 : i32
    %c0_i32_0 = arith.constant 0 : i32
    return %arg0, %c0_i32 : i32, i32
  }
}

</mosaic_0001>

<llo_original>
// kernel: tpu_custom_call.1
$region0: #{tpu_custom_call.1}
  #allocation0 [shape = 'u32[]', space=smem, size = 0x4, offset = 0x4, fixed_abs, tag = 'smem constant byte address 0x4 - core index']
  #allocation1 [shape = 'u32[144,128]{1,0:T(1,128)}', space=vmem, size = 0x12000, scoped, tag = 'internal scratch']
  #allocation2 [shape = 's32[1]{0}', space=sflag, size = 0x4, scoped, tag = 'scoped memory for tpu_custom_call.1']
  #allocation3 [shape = 's32[1]{0:T(128)S(6)}', space=smem, size = 0x200, scoped, tag = 'prefetched SMEM operand 0']
  %s0 = inlined_call_operand.<no memory space> [shape: s32[1], index: 0, kind: input, shape index: {}]
  %s1 = inlined_call_operand.vmem [shape: f32[8,4], index: 1, kind: input, shape index: {}]
  %s2 = inlined_call_operand.vmem [shape: f32[4,128], index: 2, kind: input, shape index: {}]
  %s3 = inlined_call_operand.vmem [shape: f32[1,128], index: 3, kind: input, shape index: {}]
  %s4 = inlined_call_operand.vmem [shape: f32[8,2], index: 4, kind: output, shape index: {}]
  %s5 = sld [smem:[#allocation0]]
  $region22: #{tpu_custom_call.1} parent=0
    _
  %s7 = ssub.s32 1, %s5
  %s8 = scalar_select 0, %s7, %s5
  %9 = sst [smem:[#allocation3]] %s0
  // Predicated region
  $region2: #{tpu_custom_call.1} parent=0 // pred_check
    _
  $region3: #{tpu_custom_call.1} parent=0 // pred_check_branch
    %11 = sbr.rel (0) target = $region5
  $region4: #{tpu_custom_call.1} parent=0 // pred_region
    _
  $region5: #{tpu_custom_call.1} parent=0 // pred_fallthru
    _
  // Predicated region
  $region6: #{tpu_custom_call.1} parent=0 // pred_check
    _
  $region7: #{tpu_custom_call.1} parent=0 // pred_check_branch
    %13 = sbr.rel (0) target = $region9
  $region8: #{tpu_custom_call.1} parent=0 // pred_region
    _
  $region9: #{tpu_custom_call.1} parent=0 // pred_fallthru
    _
  // Predicated region
  $region10: #{tpu_custom_call.1} parent=0 // pred_check
    _
  $region11: #{tpu_custom_call.1} parent=0 // pred_check_branch
    %15 = sbr.rel (0) target = $region13
  $region12: #{tpu_custom_call.1} parent=0 // pred_region
    _
  $region13: #{tpu_custom_call.1} parent=0 // pred_fallthru
    _
  %v16 = vld [vmem:[%s1] sm:$0xff]
  %v17 = vld [vmem:[%s2] sm:$0x1]
  %19 = vset.pattern.permute.xlu0 0
  %20 = vperm.xlu0 %19, %v16
  %v21 = vpop.permute.xlu0 %20
  %v23 = vlaneseq
  %v24 = vshrl.u32 %v23, 7
  %v25 = vsub.s32 0, %v24
  %v26 = vrot.slane %v17, %v25
  %v27 = vmul.f32 %v21, %v26
  %v28 = vld [vmem:[%s2 + $0x1] sm:$0x1]
  %29 = vset.pattern.permute.xlu0 1
  %30 = vperm.xlu0 %29, %v16
  %v31 = vpop.permute.xlu0 %30
  %v33 = vlaneseq
  %v34 = vshrl.u32 %v33, 7
  %v35 = vsub.s32 0, %v34
  %v36 = vrot.slane %v28, %v35
  %v37 = vmul.f32 %v31, %v36
  %v38 = vadd.f32 %v27, %v37
  %v39 = vld [vmem:[%s2 + $0x2] sm:$0x1]
  %40 = vset.pattern.permute.xlu0 2
  %41 = vperm.xlu0 %40, %v16
  %v42 = vpop.permute.xlu0 %41
  %v44 = vlaneseq
  %v45 = vshrl.u32 %v44, 7
  %v46 = vsub.s32 0, %v45
  %v47 = vrot.slane %v39, %v46
  %v48 = vmul.f32 %v42, %v47
  %v49 = vadd.f32 %v38, %v48
  %v50 = vld [vmem:[%s2 + $0x3] sm:$0x1]
  %51 = vset.pattern.permute.xlu0 3
  %52 = vperm.xlu0 %51, %v16
  %v53 = vpop.permute.xlu0 %52
  %v55 = vlaneseq
  %v56 = vshrl.u32 %v55, 7
  %v57 = vsub.s32 0, %v56
  %v58 = vrot.slane %v50, %v57
  %v59 = vmul.f32 %v53, %v58
  %v60 = vadd.f32 %v49, %v59
  %s61 = sld [smem:[#allocation3]]
  %s62 = smul.u32 0, 8
  %v63 = vlaneseq
  %v64 = vshrl.u32 %v63, 7
  %v65 = vstv %s62
  %v66 = vadd.s32 %v64, %v65
  %v67 = vlaneseq
  %v68 = vand.u32 %v67, 127
  %v69 = vmul.u32 %v66, 128
  %v70 = vadd.s32 %v69, %v68
  %s71 = smul.u32 %s61, 2654435769
  %v72 = vstv %s71
  %v73 = vadd.s32 %v70, %v72
  %v74 = vshrl.u32 %v73, 16
  %v75 = vxor.u32 %v73, %v74
  %v76 = vmul.u32 %v75, 2246822507
  %v77 = vshrl.u32 %v76, 13
  %v78 = vxor.u32 %v76, %v77
  %v79 = vmul.u32 %v78, 3266489909
  %v80 = vshrl.u32 %v79, 16
  %v81 = vxor.u32 %v79, %v80
  %v82 = vshrl.u32 %v81, 31
  %vm83 = vcmp.eq.s32.totalorder %v82, 1
  %vm84 = vcmp.gt.f32.partialorder %v60, 0.0
  %vm85 = vmand %vm83, %vm84
  %v86 = vmul.f32 %v60, 2.0
  %v87 = vsel %vm85, %v86, 0.0
  %v88 = vld [vmem:[%s3] sm:$0x1]
  %v90 = vlaneseq
  %v91 = vshrl.u32 %v90, 7
  %v92 = vsub.s32 0, %v91
  %v93 = vrot.slane %v88, %v92
  %v95 = vmul.f32 %v87, %v93
  %96 = vadd.xlane.f32.xlu0 %v95
  %v97 = vpop.xlane.xlu0 %96
  %v98 = vsub.f32 0.0, %v97
  %v99 = vmul.f32 %v98, 1.442695
  %v100 = vpow.pop %v99
  %v101 = vadd.f32 %v100, 1.0
  %v102 = vrcp.pop %v101
  %v103 = vmul.f32 1.0, %v102
  %v104 = vsub.f32 1.0, %v103
  %vm105 = vcmask 7168
  %v106 = vsel %vm105, %v104, %v103
  %vm107 = vcmask 15360
  %108 = vst.msk [vmem:[%s4] sm:$0xff] %vm107, %v106
  // Predicated region
  $region14: #{tpu_custom_call.1} parent=0 // pred_check
    _
  $region15: #{tpu_custom_call.1} parent=0 // pred_check_branch
    %110 = sbr.rel (0) target = $region17
  $region16: #{tpu_custom_call.1} parent=0 // pred_region
    _
  $region17: #{tpu_custom_call.1} parent=0 // pred_fallthru
    _
  // Predicated region
  $region18: #{tpu_custom_call.1} parent=0 // pred_check
    _
  $region19: #{tpu_custom_call.1} parent=0 // pred_check_branch
    %112 = sbr.rel (0) target = $region21
  $region20: #{tpu_custom_call.1} parent=0 // pred_region
    _
  $region21: #{tpu_custom_call.1} parent=0 // pred_fallthru
    _

</llo_original>
